<compile_context>
chip_gen: v5e
topology: v5e:2x2
jax: 0.10.0
libtpu: 0.0.40
codegen_flags: <defaults>
</compile_context>

<pallas_src>
import functools
import math

import jax
import jax.numpy as jnp
from jax.experimental import pallas as pl
from jax.experimental.pallas import tpu as pltpu


def _boundary_loss_kernel(lg_ref, tg_ref, out_ref, acc_ref, *, img_h, img_w):
    step = pl.program_id(1)

    @pl.when(step == 0)
    def _init():
        acc_ref[...] = jnp.zeros_like(acc_ref)

    rows, wp = lg_ref.shape

    # Hoisted seam masks, shared by both boundary computations.  Row/col indices
    # are taken modulo the image size so every packed image gets its own zero
    # padding at its own edges (and the roll wrap-around is masked off too).
    row = jax.lax.broadcasted_iota(jnp.int32, (rows, wp), 0) % img_h
    col = jax.lax.broadcasted_iota(jnp.int32, (rows, wp), 1) % img_w
    ok_up = row >= 1             # neighbour at r-1 lies inside the same image
    ok_dn = row <= img_h - 2     # neighbour at r+1 lies inside the same image
    ok_lt = col >= 1             # neighbour at c-1 lies inside the same image
    ok_rt = col <= img_w - 2     # neighbour at c+1 lies inside the same image

    def sh_up(x):   # b[r] = x[r-1]   (zero at each image's top row)
        return jnp.where(ok_up, pltpu.roll(x, shift=1, axis=0), 0.0)

    def sh_dn(x):   # b[r] = x[r+1]   (zero at each image's bottom row)
        return jnp.where(ok_dn, pltpu.roll(x, shift=rows - 1, axis=0), 0.0)

    def sh_lt(x):   # b[c] = x[c-1]   (zero at each image's left column)
        return jnp.where(ok_lt, pltpu.roll(x, shift=1, axis=1), 0.0)

    def sh_rt(x):   # b[c] = x[c+1]   (zero at each image's right column)
        return jnp.where(ok_rt, pltpu.roll(x, shift=wp - 1, axis=1), 0.0)

    def boundary(x):
        # Separable Sobel (cross-correlation, zero padding):
        #   gx = [1,2,1]^T (rows) x [-1,0,1] (cols)
        #   gy = [-1,0,1]^T (rows) x [ 1,2,1] (cols)
        up = sh_up(x)
        dn = sh_dn(x)
        t1 = up + 2.0 * x + dn      # vertical smooth    -> gx path
        t2 = dn - up                # vertical gradient  -> gy path
        gx = sh_rt(t1) - sh_lt(t1)
        gy = sh_rt(t2) + 2.0 * t2 + sh_lt(t2)
        return (gx * gx + gy * gy) > 0.25      # == (sqrt(gx^2+gy^2) > 0.5)

    probs = jax.nn.sigmoid(lg_ref[...].astype(jnp.float32))
    tgts = tg_ref[...].astype(jnp.float32)

    mismatch = boundary(probs) != boundary(tgts)     # exact 0/1 disagreement
    acc_ref[...] += mismatch.astype(jnp.float32)

    @pl.when(step == pl.num_programs(1) - 1)
    def _finish():
        total = jnp.sum(acc_ref[...])
        out_ref[...] = jnp.full(out_ref.shape, total, dtype=out_ref.dtype)


def _cdiv(a, b):
    return -(-a // b)


def _tensorcores_per_chip():
    """Best-effort TensorCores-per-chip: v7x/v4/v5p -> 2, v5e/v6e -> 1."""
    try:
        kind = jax.devices()[0].device_kind.lower()
    except Exception:
        return 1
    if ("v7" in kind) or ("v4" in kind) or ("v5p" in kind):
        return 2
    return 1


@jax.jit
def boundary_loss(logits, targets):
    """logits, targets: (N, C, H, W). Returns scalar mean boundary BCE."""
    n, c, h, w = logits.shape
    n_img = n * c

    if not jnp.issubdtype(logits.dtype, jnp.floating):
        logits = logits.astype(jnp.float32)
    if not jnp.issubdtype(targets.dtype, jnp.floating):
        targets = targets.astype(jnp.float32)

    lg = logits.reshape(n_img, h, w)
    tg = targets.reshape(n_img, h, w)

    # Lane packing: LP images side by side along the 128-lane axis.
    lp = max(1, 128 // w)
    wp = lp * w
    g_needed = _cdiv(n_img, lp)          # packed (H, WP) slabs of real work

    # TB*H (sublane extent of a block) must be a multiple of 8.
    m = 8 // math.gcd(h, 8)

    # ~2 MiB (f32-equivalent) per input block keeps 2 inputs x 2 pipeline
    # buffers + the f32 accumulator well inside every generation's VMEM.
    tb_max = max(1, (2 * 1024 * 1024) // (h * wp * 4))
    tb_max = max(m, (tb_max // m) * m)

    # Second TensorCore only on multi-TC chips and only if it gets real work.
    nc = 2 if (_tensorcores_per_chip() == 2 and g_needed >= 2 * m) else 1

    # Balance TB against the real work so padding is bounded by < one block.
    steps = _cdiv(g_needed, nc * tb_max)
    tb = _cdiv(g_needed, nc * steps)
    tb = _cdiv(tb, m) * m
    g_pad = nc * steps * tb

    # Pad with images whose boundary maps are identically zero on both sides:
    # logits = -20 -> probs ~= 2e-9 (flat, grad^2 << 0.25); targets = 0 (flat).
    extra_img = g_pad * lp - n_img
    if extra_img:
        lg = jnp.concatenate(
            [lg, jnp.full((extra_img, h, w), -20.0, lg.dtype)], axis=0)
        tg = jnp.concatenate(
            [tg, jnp.zeros((extra_img, h, w), tg.dtype)], axis=0)

    # (g_pad*lp, h, w) -> (g_pad*h, lp*w): lane-dense 2-D slab layout.
    if lp > 1:
        lg = lg.reshape(g_pad, lp, h, w).transpose(0, 2, 1, 3)
        tg = tg.reshape(g_pad, lp, h, w).transpose(0, 2, 1, 3)
    lg = lg.reshape(g_pad * h, wp)
    tg = tg.reshape(g_pad * h, wp)

    blk_rows = tb * h
    blk_elems = blk_rows * wp
    vmem_need = (2 * blk_elems * (lg.dtype.itemsize + tg.dtype.itemsize)
                 + 4 * blk_elems + 2 * 4 * 8 * 128)
    vmem_limit = int(min(64 * 1024 * 1024, max(32 * 1024 * 1024, 2 * vmem_need)))

    out = pl.pallas_call(
        functools.partial(_boundary_loss_kernel, img_h=h, img_w=w),
        out_shape=jax.ShapeDtypeStruct((nc, 8, 128), jnp.float32),
        grid_spec=pltpu.PrefetchScalarGridSpec(
            num_scalar_prefetch=0,
            grid=(nc, steps),
            in_specs=[
                pl.BlockSpec((blk_rows, wp), lambda cc, ii: (cc * steps + ii, 0)),
                pl.BlockSpec((blk_rows, wp), lambda cc, ii: (cc * steps + ii, 0)),
            ],
            out_specs=pl.BlockSpec((1, 8, 128), lambda cc, ii: (cc, 0, 0)),
            scratch_shapes=[pltpu.VMEM((blk_rows, wp), jnp.float32)],
        ),
        compiler_params=pltpu.CompilerParams(
            dimension_semantics=("parallel", "arbitrary"),
            vmem_limit_bytes=vmem_limit),
    )(lg, tg)

    # Each mismatching boundary pixel contributes exactly 100 to the BCE sum
    # (PyTorch clamps log at -100); fold the 100 and the mean into one constant.
    return jnp.sum(out[:, 0, 0]) * (100.0 / float(n * c * h * w))


def _boundary_loss_ref(logits, targets):
    """Pure-JAX reference (direct port of the PyTorch conv2d path)."""
    def boundary(x):
        x = x.astype(jnp.float32)
        h, w = x.shape[-2], x.shape[-1]
        p = jnp.pad(x, ((0, 0), (0, 0), (1, 1), (1, 1)))

        def sh(dr, dc):
            return p[:, :, 1 + dr:1 + dr + h, 1 + dc:1 + dc + w]

        gx = (-sh(-1, -1) + sh(-1, 1) - 2 * sh(0, -1) + 2 * sh(0, 1)
              - sh(1, -1) + sh(1, 1))
        gy = (-sh(-1, -1) - 2 * sh(-1, 0) - sh(-1, 1)
              + sh(1, -1) + 2 * sh(1, 0) + sh(1, 1))
        return (jnp.sqrt(gx * gx + gy * gy) > 0.5).astype(jnp.float32)

    pb = boundary(jax.nn.sigmoid(logits.astype(jnp.float32)))
    tb = boundary(targets.astype(jnp.float32))
    # Both maps are exactly 0/1, so BCE (log clamped at -100) == 100 * mismatch.
    return 100.0 * jnp.mean(jnp.abs(pb - tb))


if __name__ == "__main__":
    key = jax.random.PRNGKey(0)
    k1, k2 = jax.random.split(key)
    B, C, H, W = 2, 4, 16, 16
    # Deterministic synthetic inputs (no checkpoint / file IO).
    logits = 3.0 * jax.random.normal(k1, (B, C, H, W), dtype=jnp.float32)
    targets = (jax.random.uniform(k2, (B, C, H, W)) > 0.5).astype(jnp.float32)

    loss = boundary_loss(logits, targets)
    jax.block_until_ready(loss)

    ref = _boundary_loss_ref(logits, targets)
    # Allow a handful of threshold-ulp pixel flips (each flip = 100/2048 ~ 0.05).
    assert abs(float(loss) - float(ref)) < 0.5, (float(loss), float(ref))
    print("KERNEL_OK")
</pallas_src>

<mosaic_0001>
module attributes {stable_mosaic.version = 11 : i64} {
  func.func @_boundary_loss_kernel(%arg0: i32, %arg1: i32, %arg2: memref<16x128xf32, #tpu.memory_space<vmem>>, %arg3: memref<16x128xf32, #tpu.memory_space<vmem>>, %arg4: memref<1x8x128xf32, #tpu.memory_space<vmem>>, %arg5: memref<16x128xf32, #tpu.memory_space<vmem>>) attributes {dimension_semantics = [#tpu.dimension_semantics<parallel>, #tpu.dimension_semantics<arbitrary>], iteration_bounds = array<i64: 1, 1>, scalar_prefetch = 0 : i64, scratch_operands = 1 : i64, tpu.core_type = #tpu.core_type<tc>, window_params = [{transform_indices = @transform_0, window_bounds = array<i64: 16, 128>}, {transform_indices = @transform_1, window_bounds = array<i64: 16, 128>}, {transform_indices = @transform_2, window_bounds = array<i64: 1, 8, 128>}]} {
    %c0_i32 = arith.constant 0 : i32
    %0 = arith.cmpi eq, %arg1, %c0_i32 : i32
    %1 = arith.extui %0 : i1 to i32
    %c0_i32_0 = arith.constant 0 : i32
    %2 = arith.cmpi ne, %1, %c0_i32_0 : i32
    scf.if %2 {
      %cst_51 = arith.constant 0.000000e+00 : f32
      %127 = vector.broadcast %cst_51 : f32 to vector<16x128xf32>
      %c0_52 = arith.constant 0 : index
      %c0_53 = arith.constant 0 : index
      %128 = vector.load %arg5[%c0_52, %c0_53] : memref<16x128xf32, #tpu.memory_space<vmem>>, vector<16x128xf32>
      tpu.vector_store %arg5[%c0_52, %c0_53], %127 {strides = array<i32>} : memref<16x128xf32, #tpu.memory_space<vmem>>, vector<16x128xf32>,
    } else {
    }
    %3 = tpu.iota {dimensions = array<i32: 0>} : vector<16x128xi32>
    %c16_i32 = arith.constant 16 : i32
    %c0_i32_1 = arith.constant 0 : i32
    %4 = arith.cmpi eq, %c16_i32, %c0_i32_1 : i32
    %c1_i32 = arith.constant 1 : i32
    %5 = arith.select %4, %c1_i32, %c16_i32 : i32
    %6 = vector.broadcast %5 : i32 to vector<16x128xi32>
    %7 = arith.remsi %3, %6 : vector<16x128xi32>
    %c0_i32_2 = arith.constant 0 : i32
    %8 = vector.broadcast %c0_i32_2 : i32 to vector<16x128xi32>
    %9 = arith.cmpi ne, %7, %8 : vector<16x128xi32>
    %c0_i32_3 = arith.constant 0 : i32
    %10 = vector.broadcast %c0_i32_3 : i32 to vector<16x128xi32>
    %11 = arith.cmpi slt, %7, %10 : vector<16x128xi32>
    %c0_i32_4 = arith.constant 0 : i32
    %12 = arith.cmpi slt, %5, %c0_i32_4 : i32
    %13 = vector.broadcast %12 : i1 to vector<16x128xi1>
    %14 = vector.broadcast %13 : vector<16x128xi1> to vector<16x128xi1>
    %15 = arith.xori %11, %14 : vector<16x128xi1>
    %16 = arith.andi %15, %9 : vector<16x128xi1>
    %17 = vector.broadcast %5 : i32 to vector<16x128xi32>
    %18 = arith.addi %7, %17 : vector<16x128xi32>
    %19 = arith.select %16, %18, %7 : vector<16x128xi1>, vector<16x128xi32>
    %20 = tpu.iota {dimensions = array<i32: 1>} : vector<16x128xi32>
    %c16_i32_5 = arith.constant 16 : i32
    %c0_i32_6 = arith.constant 0 : i32
    %21 = arith.cmpi eq, %c16_i32_5, %c0_i32_6 : i32
    %c1_i32_7 = arith.constant 1 : i32
    %22 = arith.select %21, %c1_i32_7, %c16_i32_5 : i32
    %23 = vector.broadcast %22 : i32 to vector<16x128xi32>
    %24 = arith.remsi %20, %23 : vector<16x128xi32>
    %c0_i32_8 = arith.constant 0 : i32
    %25 = vector.broadcast %c0_i32_8 : i32 to vector<16x128xi32>
    %26 = arith.cmpi ne, %24, %25 : vector<16x128xi32>
    %c0_i32_9 = arith.constant 0 : i32
    %27 = vector.broadcast %c0_i32_9 : i32 to vector<16x128xi32>
    %28 = arith.cmpi slt, %24, %27 : vector<16x128xi32>
    %c0_i32_10 = arith.constant 0 : i32
    %29 = arith.cmpi slt, %22, %c0_i32_10 : i32
    %30 = vector.broadcast %29 : i1 to vector<16x128xi1>
    %31 = vector.broadcast %30 : vector<16x128xi1> to vector<16x128xi1>
    %32 = arith.xori %28, %31 : vector<16x128xi1>
    %33 = arith.andi %32, %26 : vector<16x128xi1>
    %34 = vector.broadcast %22 : i32 to vector<16x128xi32>
    %35 = arith.addi %24, %34 : vector<16x128xi32>
    %36 = arith.select %33, %35, %24 : vector<16x128xi1>, vector<16x128xi32>
    %c1_i32_11 = arith.constant 1 : i32
    %37 = vector.broadcast %c1_i32_11 : i32 to vector<16x128xi32>
    %38 = arith.cmpi sge, %19, %37 : vector<16x128xi32>
    %c14_i32 = arith.constant 14 : i32
    %39 = vector.broadcast %c14_i32 : i32 to vector<16x128xi32>
    %40 = arith.cmpi sle, %19, %39 : vector<16x128xi32>
    %c1_i32_12 = arith.constant 1 : i32
    %41 = vector.broadcast %c1_i32_12 : i32 to vector<16x128xi32>
    %42 = arith.cmpi sge, %36, %41 : vector<16x128xi32>
    %c14_i32_13 = arith.constant 14 : i32
    %43 = vector.broadcast %c14_i32_13 : i32 to vector<16x128xi32>
    %44 = arith.cmpi sle, %36, %43 : vector<16x128xi32>
    %c0 = arith.constant 0 : index
    %c0_14 = arith.constant 0 : index
    %45 = vector.load %arg2[%c0, %c0_14] : memref<16x128xf32, #tpu.memory_space<vmem>>, vector<16x128xf32>
    %46 = arith.negf %45 : vector<16x128xf32>
    %47 = math.exp %46 : vector<16x128xf32>
    %cst = arith.constant 1.000000e+00 : f32
    %48 = vector.broadcast %cst : f32 to vector<16x128xf32>
    %49 = arith.addf %48, %47 : vector<16x128xf32>
    %50 = arith.divf %48, %49 : vector<16x128xf32>
    %c0_15 = arith.constant 0 : index
    %c0_16 = arith.constant 0 : index
    %51 = vector.load %arg3[%c0_15, %c0_16] : memref<16x128xf32, #tpu.memory_space<vmem>>, vector<16x128xf32>
    %c1_i32_17 = arith.constant 1 : i32
    %52 = tpu.dynamic_rotate %50 by %c1_i32_17 dim 0 : vector<16x128xf32>, i32 -> vector<16x128xf32>
    %cst_18 = arith.constant 0.000000e+00 : f32
    %53 = vector.broadcast %cst_18 : f32 to vector<16x128xf32>
    %54 = arith.select %38, %52, %53 : vector<16x128xi1>, vector<16x128xf32>
    %c15_i32 = arith.constant 15 : i32
    %55 = tpu.dynamic_rotate %50 by %c15_i32 dim 0 : vector<16x128xf32>, i32 -> vector<16x128xf32>
    %cst_19 = arith.constant 0.000000e+00 : f32
    %56 = vector.broadcast %cst_19 : f32 to vector<16x128xf32>
    %57 = arith.select %40, %55, %56 : vector<16x128xi1>, vector<16x128xf32>
    %cst_20 = arith.constant 2.000000e+00 : f32
    %58 = vector.broadcast %cst_20 : f32 to vector<16x128xf32>
    %59 = arith.mulf %58, %50 : vector<16x128xf32>
    %60 = arith.addf %54, %59 : vector<16x128xf32>
    %61 = arith.addf %60, %57 : vector<16x128xf32>
    %62 = arith.subf %57, %54 : vector<16x128xf32>
    %c127_i32 = arith.constant 127 : i32
    %63 = tpu.dynamic_rotate %61 by %c127_i32 dim 1 : vector<16x128xf32>, i32 -> vector<16x128xf32>
    %cst_21 = arith.constant 0.000000e+00 : f32
    %64 = vector.broadcast %cst_21 : f32 to vector<16x128xf32>
    %65 = arith.select %44, %63, %64 : vector<16x128xi1>, vector<16x128xf32>
    %c1_i32_22 = arith.constant 1 : i32
    %66 = tpu.dynamic_rotate %61 by %c1_i32_22 dim 1 : vector<16x128xf32>, i32 -> vector<16x128xf32>
    %cst_23 = arith.constant 0.000000e+00 : f32
    %67 = vector.broadcast %cst_23 : f32 to vector<16x128xf32>
    %68 = arith.select %42, %66, %67 : vector<16x128xi1>, vector<16x128xf32>
    %69 = arith.subf %65, %68 : vector<16x128xf32>
    %c127_i32_24 = arith.constant 127 : i32
    %70 = tpu.dynamic_rotate %62 by %c127_i32_24 dim 1 : vector<16x128xf32>, i32 -> vector<16x128xf32>
    %cst_25 = arith.constant 0.000000e+00 : f32
    %71 = vector.broadcast %cst_25 : f32 to vector<16x128xf32>
    %72 = arith.select %44, %70, %71 : vector<16x128xi1>, vector<16x128xf32>
    %cst_26 = arith.constant 2.000000e+00 : f32
    %73 = vector.broadcast %cst_26 : f32 to vector<16x128xf32>
    %74 = arith.mulf %73, %62 : vector<16x128xf32>
    %75 = arith.addf %72, %74 : vector<16x128xf32>
    %c1_i32_27 = arith.constant 1 : i32
    %76 = tpu.dynamic_rotate %62 by %c1_i32_27 dim 1 : vector<16x128xf32>, i32 -> vector<16x128xf32>
    %cst_28 = arith.constant 0.000000e+00 : f32
    %77 = vector.broadcast %cst_28 : f32 to vector<16x128xf32>
    %78 = arith.select %42, %76, %77 : vector<16x128xi1>, vector<16x128xf32>
    %79 = arith.addf %75, %78 : vector<16x128xf32>
    %80 = arith.mulf %69, %69 : vector<16x128xf32>
    %81 = arith.mulf %79, %79 : vector<16x128xf32>
    %82 = arith.addf %80, %81 : vector<16x128xf32>
    %cst_29 = arith.constant 2.500000e-01 : f32
    %83 = vector.broadcast %cst_29 : f32 to vector<16x128xf32>
    %84 = arith.cmpf ogt, %82, %83 : vector<16x128xf32>
    %c1_i32_30 = arith.constant 1 : i32
    %85 = tpu.dynamic_rotate %51 by %c1_i32_30 dim 0 : vector<16x128xf32>, i32 -> vector<16x128xf32>
    %cst_31 = arith.constant 0.000000e+00 : f32
    %86 = vector.broadcast %cst_31 : f32 to vector<16x128xf32>
    %87 = arith.select %38, %85, %86 : vector<16x128xi1>, vector<16x128xf32>
    %c15_i32_32 = arith.constant 15 : i32
    %88 = tpu.dynamic_rotate %51 by %c15_i32_32 dim 0 : vector<16x128xf32>, i32 -> vector<16x128xf32>
    %cst_33 = arith.constant 0.000000e+00 : f32
    %89 = vector.broadcast %cst_33 : f32 to vector<16x128xf32>
    %90 = arith.select %40, %88, %89 : vector<16x128xi1>, vector<16x128xf32>
    %cst_34 = arith.constant 2.000000e+00 : f32
    %91 = vector.broadcast %cst_34 : f32 to vector<16x128xf32>
    %92 = arith.mulf %91, %51 : vector<16x128xf32>
    %93 = arith.addf %87, %92 : vector<16x128xf32>
    %94 = arith.addf %93, %90 : vector<16x128xf32>
    %95 = arith.subf %90, %87 : vector<16x128xf32>
    %c127_i32_35 = arith.constant 127 : i32
    %96 = tpu.dynamic_rotate %94 by %c127_i32_35 dim 1 : vector<16x128xf32>, i32 -> vector<16x128xf32>
    %cst_36 = arith.constant 0.000000e+00 : f32
    %97 = vector.broadcast %cst_36 : f32 to vector<16x128xf32>
    %98 = arith.select %44, %96, %97 : vector<16x128xi1>, vector<16x128xf32>
    %c1_i32_37 = arith.constant 1 : i32
    %99 = tpu.dynamic_rotate %94 by %c1_i32_37 dim 1 : vector<16x128xf32>, i32 -> vector<16x128xf32>
    %cst_38 = arith.constant 0.000000e+00 : f32
    %100 = vector.broadcast %cst_38 : f32 to vector<16x128xf32>
    %101 = arith.select %42, %99, %100 : vector<16x128xi1>, vector<16x128xf32>
    %102 = arith.subf %98, %101 : vector<16x128xf32>
    %c127_i32_39 = arith.constant 127 : i32
    %103 = tpu.dynamic_rotate %95 by %c127_i32_39 dim 1 : vector<16x128xf32>, i32 -> vector<16x128xf32>
    %cst_40 = arith.constant 0.000000e+00 : f32
    %104 = vector.broadcast %cst_40 : f32 to vector<16x128xf32>
    %105 = arith.select %44, %103, %104 : vector<16x128xi1>, vector<16x128xf32>
    %cst_41 = arith.constant 2.000000e+00 : f32
    %106 = vector.broadcast %cst_41 : f32 to vector<16x128xf32>
    %107 = arith.mulf %106, %95 : vector<16x128xf32>
    %108 = arith.addf %105, %107 : vector<16x128xf32>
    %c1_i32_42 = arith.constant 1 : i32
    %109 = tpu.dynamic_rotate %95 by %c1_i32_42 dim 1 : vector<16x128xf32>, i32 -> vector<16x128xf32>
    %cst_43 = arith.constant 0.000000e+00 : f32
    %110 = vector.broadcast %cst_43 : f32 to vector<16x128xf32>
    %111 = arith.select %42, %109, %110 : vector<16x128xi1>, vector<16x128xf32>
    %112 = arith.addf %108, %111 : vector<16x128xf32>
    %113 = arith.mulf %102, %102 : vector<16x128xf32>
    %114 = arith.mulf %112, %112 : vector<16x128xf32>
    %115 = arith.addf %113, %114 : vector<16x128xf32>
    %cst_44 = arith.constant 2.500000e-01 : f32
    %116 = vector.broadcast %cst_44 : f32 to vector<16x128xf32>
    %117 = arith.cmpf ogt, %115, %116 : vector<16x128xf32>
    %118 = arith.xori %84, %117 : vector<16x128xi1>
    %c0_45 = arith.constant 0 : index
    %c0_46 = arith.constant 0 : index
    %119 = vector.load %arg5[%c0_45, %c0_46] : memref<16x128xf32, #tpu.memory_space<vmem>>, vector<16x128xf32>
    %120 = arith.extui %118 : vector<16x128xi1> to vector<16x128xi32>
    %121 = arith.sitofp %120 : vector<16x128xi32> to vector<16x128xf32>
    %122 = arith.addf %119, %121 : vector<16x128xf32>
    %c0_47 = arith.constant 0 : index
    %c0_48 = arith.constant 0 : index
    %123 = vector.load %arg5[%c0_47, %c0_48] : memref<16x128xf32, #tpu.memory_space<vmem>>, vector<16x128xf32>
    tpu.vector_store %arg5[%c0_47, %c0_48], %122 {strides = array<i32>} : memref<16x128xf32, #tpu.memory_space<vmem>>, vector<16x128xf32>,
    %c0_i32_49 = arith.constant 0 : i32
    %124 = arith.cmpi eq, %arg1, %c0_i32_49 : i32
    %125 = arith.extui %124 : i1 to i32
    %c0_i32_50 = arith.constant 0 : i32
    %126 = arith.cmpi ne, %125, %c0_i32_50 : i32
    scf.if %126 {
      %c0_51 = arith.constant 0 : index
      %c0_52 = arith.constant 0 : index
      %127 = vector.load %arg5[%c0_51, %c0_52] : memref<16x128xf32, #tpu.memory_space<vmem>>, vector<16x128xf32>
      %128 = vector.shape_cast %127 : vector<16x128xf32> to vector<1x16x128xf32>
      %cst_53 = arith.constant dense<0.000000e+00> : vector<1xf32>
      %129 = vector.multi_reduction <add>, %128, %cst_53 [1, 2] : vector<1x16x128xf32> to vector<1xf32>
      %130 = vector.shape_cast %129 : vector<1xf32> to vector<1x1x1xf32>
      %131 = vector.extract %130[0, 0, 0] : f32 from vector<1x1x1xf32>
      %132 = vector.broadcast %131 : f32 to vector<1x8x128xf32>
      %c0_54 = arith.constant 0 : index
      %c0_55 = arith.constant 0 : index
      %c0_56 = arith.constant 0 : index
      %133 = vector.load %arg4[%c0_54, %c0_55, %c0_56] : memref<1x8x128xf32, #tpu.memory_space<vmem>>, vector<1x8x128xf32>
      tpu.vector_store %arg4[%c0_54, %c0_55, %c0_56], %132 {strides = array<i32>} : memref<1x8x128xf32, #tpu.memory_space<vmem>>, vector<1x8x128xf32>,
    } else {
    }
    return
  }
  func.func @transform_0(%arg0: i32, %arg1: i32) -> (i32, i32) {
    %c1_i32 = arith.constant 1 : i32
    %0 = arith.muli %arg0, %c1_i32 : i32
    %1 = arith.addi %0, %arg1 : i32
    %c0_i32 = arith.constant 0 : i32
    %c0_i32_0 = arith.constant 0 : i32
    return %1, %c0_i32 : i32, i32
  }
  func.func @transform_1(%arg0: i32, %arg1: i32) -> (i32, i32) {
    %c1_i32 = arith.constant 1 : i32
    %0 = arith.muli %arg0, %c1_i32 : i32
    %1 = arith.addi %0, %arg1 : i32
    %c0_i32 = arith.constant 0 : i32
    %c0_i32_0 = arith.constant 0 : i32
    return %1, %c0_i32 : i32, i32
  }
  func.func @transform_2(%arg0: i32, %arg1: i32) -> (i32, i32, i32) {
    %c0_i32 = arith.constant 0 : i32
    %c0_i32_0 = arith.constant 0 : i32
    %c0_i32_1 = arith.constant 0 : i32
    return %arg0, %c0_i32, %c0_i32_0 : i32, i32, i32
  }
}

</mosaic_0001>

<llo_original>
// kernel: boundary_loss.1
$region0: #{boundary_loss.1}
  #allocation0 [shape = 'u32[]', space=smem, size = 0x4, offset = 0x4, fixed_abs, tag = 'smem constant byte address 0x4 - core index']
  #allocation1 [shape = 'u32[72,128]{1,0:T(1,128)}', space=vmem, size = 0x9000, scoped, tag = 'internal scratch']
  #allocation2 [shape = 'f32[16,128]{1,0:T(8,128)}', space=vmem, size = 0x2000, scoped, tag = 'scratch operand']
  %s0 = inlined_call_operand.vmem [shape: f32[16,128], index: 0, kind: input, shape index: {}]
  %s1 = inlined_call_operand.vmem [shape: f32[16,128], index: 1, kind: input, shape index: {}]
  %s2 = inlined_call_operand.vmem [shape: f32[1,8,128], index: 2, kind: output, shape index: {}]
  %s3 = sld [smem:[#allocation0]]
  $region26: #{boundary_loss.1} parent=0
    _
  %s5 = ssub.s32 1, %s3
  %s6 = scalar_select 0, %s5, %s3
  // Predicated region
  $region2: #{boundary_loss.1} parent=0 // pred_check
    _
  $region3: #{boundary_loss.1} parent=0 // pred_check_branch
    %8 = sbr.rel (0) target = $region5
  $region4: #{boundary_loss.1} parent=0 // pred_region
    %s9 = sadd.s32 0, 0
    %s10 = smul.u32 2, %s9
    %p11 = scmp.lt.s32.totalorder %s10, 1
    %s12 = scalar_select %p11, %s10, 1
    %s13 = smul.addr %s12, 8
    %s14 = scalar_lea.vmem %s0, %s13
    %s15 = sadd.s32 0, 0
    %s16 = smul.u32 2, %s15
  $region5: #{boundary_loss.1} parent=0 // pred_fallthru
    _
  // Predicated region
  $region6: #{boundary_loss.1} parent=0 // pred_check
    _
  $region7: #{boundary_loss.1} parent=0 // pred_check_branch
    %18 = sbr.rel (0) target = $region9
  $region8: #{boundary_loss.1} parent=0 // pred_region
    %s19 = sadd.s32 0, 0
    %s20 = smul.u32 2, %s19
    %p21 = scmp.lt.s32.totalorder %s20, 1
    %s22 = scalar_select %p21, %s20, 1
    %s23 = smul.addr %s22, 8
    %s24 = scalar_lea.vmem %s1, %s23
    %s25 = sadd.s32 0, 0
    %s26 = smul.u32 2, %s25
  $region9: #{boundary_loss.1} parent=0 // pred_fallthru
    _
  %s27 = sadd.s32 0, 0
  %s28 = smul.u32 2, %s27
  %p29 = scmp.lt.s32.totalorder %s28, 1
  %s30 = scalar_select %p29, %s28, 1
  %s31 = smul.addr %s30, 8
  %s32 = scalar_lea.vmem %s0, %s31
  %s33 = sadd.s32 0, 0
  %s34 = smul.u32 2, %s33
  %p35 = scmp.lt.s32.totalorder %s34, 1
  %s36 = scalar_select %p35, %s34, 1
  %s37 = smul.addr %s36, 8
  %s38 = scalar_lea.vmem %s1, %s37
  %s39 = sadd.s32 0, 0
  %s40 = smul.u32 2, %s39
  %p41 = scmp.lt.s32.totalorder %s40, 1
  %s42 = scalar_select %p41, %s40, 1
  %s43 = smul.addr %s42, 8
  %s44 = scalar_lea.vmem %s0, %s43
  %s45 = sadd.s32 0, 0
  %s46 = smul.u32 2, %s45
  %s47 = sadd.s32 0, 0
  %s48 = smul.u32 2, %s47
  %p49 = scmp.lt.s32.totalorder %s48, 1
  %s50 = scalar_select %p49, %s48, 1
  %s51 = smul.addr %s50, 8
  %s52 = scalar_lea.vmem %s1, %s51
  %s53 = sadd.s32 0, 0
  %s54 = smul.u32 2, %s53
  %p55 = scmp.eq.s32.totalorder 0, 0
  // Predicated region
  $region10: #{boundary_loss.1} parent=0 // pred_check
    %p56 = pneg %p55
  $region11: #{boundary_loss.1} parent=0 // pred_check_branch
    %58 = sbr.rel (%p56) target = $region13
  $region12: #{boundary_loss.1} parent=0 // pred_region
    %59 = vst [vmem:[#allocation2] sm:$0xff] 0.0
    %60 = vst [vmem:[#allocation2 + $0x8] sm:$0xff] 0.0
  $region13: #{boundary_loss.1} parent=0 // pred_fallthru
    _
  %v61 = vlaneseq
  %v62 = vshrl.u32 %v61, 7
  %v63 = vadd.s32 %v62, 8
  %vm64 = vcmp.lt.s32.totalorder %v62, 0
  %v65 = vsub.s32 0, %v62
  %v66 = vsel %vm64, %v65, %v62
  %v67 = vshrl.u32 %v66, 4
  %v68 = vand.u32 %v66, 15
  %v69 = vsub.s32 0, %v68
  %v70 = vsel %vm64, %v69, %v68
  %vm71 = vcmp.lt.s32.totalorder %v63, 0
  %v72 = vsub.s32 0, %v63
  %v73 = vsel %vm71, %v72, %v63
  %v74 = vshrl.u32 %v73, 4
  %v75 = vand.u32 %v73, 15
  %v76 = vsub.s32 0, %v75
  %v77 = vsel %vm71, %v76, %v75
  %vm78 = vcmp.ne.s32.totalorder %v70, 0
  %vm79 = vcmp.ne.s32.totalorder %v77, 0
  %vm80 = vcmp.lt.s32.totalorder %v70, 0
  %vm81 = vcmp.lt.s32.totalorder %v77, 0
  %vm82 = vmand %vm80, %vm78
  %vm83 = vmand %vm81, %vm79
  %v84 = vadd.s32 %v70, 16
  %v85 = vadd.s32 %v77, 16
  %v86 = vsel %vm82, %v84, %v70
  %v87 = vsel %vm83, %v85, %v77
  %v88 = vlaneseq
  %v89 = vand.u32 %v88, 127
  %vm90 = vcmp.lt.s32.totalorder %v89, 0
  %v91 = vsub.s32 0, %v89
  %v92 = vsel %vm90, %v91, %v89
  %v93 = vshrl.u32 %v92, 4
  %v94 = vand.u32 %v92, 15
  %v95 = vsub.s32 0, %v94
  %v96 = vsel %vm90, %v95, %v94
  %vm97 = vcmp.ne.s32.totalorder %v96, 0
  %vm98 = vcmp.lt.s32.totalorder %v96, 0
  %vm99 = vmand %vm98, %vm97
  %v100 = vadd.s32 %v96, 16
  %v101 = vsel %vm99, %v100, %v96
  %vm102 = vcmp.ge.s32.totalorder %v86, 1
  %vm103 = vcmp.ge.s32.totalorder %v87, 1
  %vm104 = vcmp.le.s32.totalorder %v86, 14
  %vm105 = vcmp.le.s32.totalorder %v87, 14
  %vm106 = vcmp.ge.s32.totalorder %v101, 1
  %vm107 = vcmp.le.s32.totalorder %v101, 14
  %v108 = vld [vmem:[%s44] sm:$0xff]
  %v109 = vld [vmem:[%s44 + $0x8] sm:$0xff]
  %v110 = vxor.u32 %v108, 2147483648
  %v111 = vxor.u32 %v109, 2147483648
  %v112 = vmul.f32 %v110, 1.442695
  %v113 = vpow.pop %v112
  %v114 = vmul.f32 %v111, 1.442695
  %v115 = vpow.pop %v114
  %v116 = vadd.f32 %v113, 1.0
  %v117 = vadd.f32 %v115, 1.0
  %v118 = vrcp.pop %v116
  %v119 = vmul.f32 %v116, %v118
  %v120 = vsub.f32 1.0, %v119
  %v121 = vmul.f32 %v118, %v120
  %v122 = vadd.f32 %v118, %v121
  %vm123 = vweird.f32 %v116
  %vm124 = vweird.f32 %v118
  %vm125 = vmor %vm123, %vm124
  %v126 = vsel %vm125, %v118, %v122
  %v127 = vand.u32 2147483647, %v116
  %vm128 = vcmp.eq.f32.partialorder %v127, 8.507059e+37
  %v129 = vand.u32 %v116, 2147483648
  %v130 = vor.u32 1.1754944e-38, %v129
  %v131 = vsel %vm128, %v130, %v126
  %v132 = vmul.f32 1.0, %v131
  %v133 = vrcp.pop %v117
  %v134 = vmul.f32 %v117, %v133
  %v135 = vsub.f32 1.0, %v134
  %v136 = vmul.f32 %v133, %v135
  %v137 = vadd.f32 %v133, %v136
  %vm138 = vweird.f32 %v117
  %vm139 = vweird.f32 %v133
  %vm140 = vmor %vm138, %vm139
  %v141 = vsel %vm140, %v133, %v137
  %v142 = vand.u32 2147483647, %v117
  %vm143 = vcmp.eq.f32.partialorder %v142, 8.507059e+37
  %v144 = vand.u32 %v117, 2147483648
  %v145 = vor.u32 1.1754944e-38, %v144
  %v146 = vsel %vm143, %v145, %v141
  %v147 = vmul.f32 1.0, %v146
  %v148 = vld [vmem:[%s52] sm:$0xff]
  %v149 = vld [vmem:[%s52 + $0x8] sm:$0xff]
  %v150 = vrot.slane %v132, 7
  %v151 = vrot.slane %v147, 7
  %vm152 = vcmp.lt.s32.totalorder %v62, 1
  %v153 = vsel %vm152, %v150, %v151
  %v154 = vsel %vm152, %v151, %v150
  %v155 = vsel %vm102, %v154, 0.0
  %v156 = vsel %vm103, %v153, 0.0
  %v157 = vrot.slane %v132, 1
  %v158 = vrot.slane %v147, 1
  %vm159 = vcmp.lt.s32.totalorder %v62, 7
  %v160 = vsel %vm159, %v157, %v158
  %v161 = vsel %vm159, %v158, %v157
  %v162 = vsel %vm104, %v160, 0.0
  %v163 = vsel %vm105, %v161, 0.0
  %v164 = vmul.f32 %v132, 2.0
  %v165 = vmul.f32 %v147, 2.0
  %v166 = vadd.f32 %v155, %v164
  %v167 = vadd.f32 %v156, %v165
  %v168 = vadd.f32 %v166, %v162
  %v169 = vadd.f32 %v167, %v163
  %v170 = vsub.f32 %v162, %v155
  %v171 = vsub.f32 %v163, %v156
  %172 = vrot.lane.b32.xlu0 %v168, 127
  %v173 = vpop.permute.xlu0 %172
  %174 = vrot.lane.b32.xlu0 %v169, 127
  %v175 = vpop.permute.xlu0 %174
  %v176 = vsel %vm107, %v173, 0.0
  %v177 = vsel %vm107, %v175, 0.0
  %178 = vrot.lane.b32.xlu0 %v168, 1
  %v179 = vpop.permute.xlu0 %178
  %180 = vrot.lane.b32.xlu0 %v169, 1
  %v181 = vpop.permute.xlu0 %180
  %v182 = vsel %vm106, %v179, 0.0
  %v183 = vsel %vm106, %v181, 0.0
  %v184 = vsub.f32 %v176, %v182
  %v185 = vsub.f32 %v177, %v183
  %186 = vrot.lane.b32.xlu0 %v170, 127
  %v187 = vpop.permute.xlu0 %186
  %188 = vrot.lane.b32.xlu0 %v171, 127
  %v189 = vpop.permute.xlu0 %188
  %v190 = vsel %vm107, %v187, 0.0
  %v191 = vsel %vm107, %v189, 0.0
  %v192 = vmul.f32 %v170, 2.0
  %v193 = vmul.f32 %v171, 2.0
  %v194 = vadd.f32 %v190, %v192
  %v195 = vadd.f32 %v191, %v193
  %196 = vrot.lane.b32.xlu0 %v170, 1
  %v197 = vpop.permute.xlu0 %196
  %198 = vrot.lane.b32.xlu0 %v171, 1
  %v199 = vpop.permute.xlu0 %198
  %v200 = vsel %vm106, %v197, 0.0
  %v201 = vsel %vm106, %v199, 0.0
  %v202 = vadd.f32 %v194, %v200
  %v203 = vadd.f32 %v195, %v201
  %v204 = vmul.f32 %v184, %v184
  %v205 = vmul.f32 %v185, %v185
  %v206 = vmul.f32 %v202, %v202
  %v207 = vmul.f32 %v203, %v203
  %v208 = vadd.f32 %v204, %v206
  %v209 = vadd.f32 %v205, %v207
  %vm210 = vcmp.gt.f32.partialorder %v208, 0.25
  %vm211 = vcmp.gt.f32.partialorder %v209, 0.25
  %v212 = vrot.slane %v148, 7
  %v213 = vrot.slane %v149, 7
  %v214 = vsel %vm152, %v212, %v213
  %v215 = vsel %vm152, %v213, %v212
  %v216 = vsel %vm102, %v215, 0.0
  %v217 = vsel %vm103, %v214, 0.0
  %v218 = vrot.slane %v148, 1
  %v219 = vrot.slane %v149, 1
  %v220 = vsel %vm159, %v218, %v219
  %v221 = vsel %vm159, %v219, %v218
  %v222 = vsel %vm104, %v220, 0.0
  %v223 = vsel %vm105, %v221, 0.0
  %v224 = vmul.f32 %v148, 2.0
  %v225 = vmul.f32 %v149, 2.0
  %v226 = vadd.f32 %v216, %v224
  %v227 = vadd.f32 %v217, %v225
  %v228 = vadd.f32 %v226, %v222
  %v229 = vadd.f32 %v227, %v223
  %v230 = vsub.f32 %v222, %v216
  %v231 = vsub.f32 %v223, %v217
  %232 = vrot.lane.b32.xlu0 %v228, 127
  %v233 = vpop.permute.xlu0 %232
  %234 = vrot.lane.b32.xlu0 %v229, 127
  %v235 = vpop.permute.xlu0 %234
  %v236 = vsel %vm107, %v233, 0.0
  %v237 = vsel %vm107, %v235, 0.0
  %238 = vrot.lane.b32.xlu0 %v228, 1
  %v239 = vpop.permute.xlu0 %238
  %240 = vrot.lane.b32.xlu0 %v229, 1
  %v241 = vpop.permute.xlu0 %240
  %v242 = vsel %vm106, %v239, 0.0
  %v243 = vsel %vm106, %v241, 0.0
  %v244 = vsub.f32 %v236, %v242
  %v245 = vsub.f32 %v237, %v243
  %246 = vrot.lane.b32.xlu0 %v230, 127
  %v247 = vpop.permute.xlu0 %246
  %248 = vrot.lane.b32.xlu0 %v231, 127
  %v249 = vpop.permute.xlu0 %248
  %v250 = vsel %vm107, %v247, 0.0
  %v251 = vsel %vm107, %v249, 0.0
  %v252 = vmul.f32 %v230, 2.0
  %v253 = vmul.f32 %v231, 2.0
  %v254 = vadd.f32 %v250, %v252
  %v255 = vadd.f32 %v251, %v253
  %256 = vrot.lane.b32.xlu0 %v230, 1
  %v257 = vpop.permute.xlu0 %256
  %258 = vrot.lane.b32.xlu0 %v231, 1
  %v259 = vpop.permute.xlu0 %258
  %v260 = vsel %vm106, %v257, 0.0
  %v261 = vsel %vm106, %v259, 0.0
  %v262 = vadd.f32 %v254, %v260
  %v263 = vadd.f32 %v255, %v261
  %v264 = vmul.f32 %v244, %v244
  %v265 = vmul.f32 %v245, %v245
  %v266 = vmul.f32 %v262, %v262
  %v267 = vmul.f32 %v263, %v263
  %v268 = vadd.f32 %v264, %v266
  %v269 = vadd.f32 %v265, %v267
  %vm270 = vcmp.gt.f32.partialorder %v268, 0.25
  %vm271 = vcmp.gt.f32.partialorder %v269, 0.25
  %vm272 = vmxor %vm210, %vm270
  %vm273 = vmxor %vm211, %vm271
  %v274 = vld [vmem:[#allocation2] sm:$0xff]
  %v275 = vld [vmem:[#allocation2 + $0x8] sm:$0xff]
  %v276 = vsel %vm272, 1, 0
  %v277 = vsel %vm273, 1, 0
  %v278 = vcvt.s32.f32 %v276
  %v279 = vcvt.s32.f32 %v277
  %v280 = vadd.f32 %v274, %v278
  %v281 = vadd.f32 %v275, %v279
  %282 = vst [vmem:[#allocation2] sm:$0xff] %v280
  %283 = vst [vmem:[#allocation2 + $0x8] sm:$0xff] %v281
  // Predicated region
  $region14: #{boundary_loss.1} parent=0 // pred_check
    %p284 = pneg %p55
  $region15: #{boundary_loss.1} parent=0 // pred_check_branch
    %286 = sbr.rel (%p284) target = $region17
  $region16: #{boundary_loss.1} parent=0 // pred_region
    %v287 = vld [vmem:[#allocation2] sm:$0xff]
    %v288 = vld [vmem:[#allocation2 + $0x8] sm:$0xff]
    %v289 = vadd.f32 %v287, %v288
    %290 = vadd.xlane.f32.xlu0 %v289
    %v291 = vpop.xlane.xlu0 %290
    %v292 = vrot.slane %v291, 4
    %v293 = vadd.f32 %v291, %v292
    %v294 = vrot.slane %v293, 2
    %v295 = vadd.f32 %v293, %v294
    %v296 = vrot.slane %v295, 1
    %v297 = vadd.f32 %v295, %v296
    %s298 = vtos %v297
    %v299 = vstv %s298
    %300 = vst [vmem:[%s2] sm:$0xff] %v299
  $region17: #{boundary_loss.1} parent=0 // pred_fallthru
    _
  // Predicated region
  $region18: #{boundary_loss.1} parent=0 // pred_check
    _
  $region19: #{boundary_loss.1} parent=0 // pred_check_branch
    %302 = sbr.rel (0) target = $region21
  $region20: #{boundary_loss.1} parent=0 // pred_region
    _
  $region21: #{boundary_loss.1} parent=0 // pred_fallthru
    _
  // Predicated region
  $region22: #{boundary_loss.1} parent=0 // pred_check
    _
  $region23: #{boundary_loss.1} parent=0 // pred_check_branch
    %304 = sbr.rel (0) target = $region25
  $region24: #{boundary_loss.1} parent=0 // pred_region
    _
  $region25: #{boundary_loss.1} parent=0 // pred_fallthru
    _

</llo_original>
